<compile_context>
chip_gen: v5e
topology: v5e:2x2
jax: 0.10.0
libtpu: 0.0.40
codegen_flags: <defaults>
</compile_context>

<pallas_src>
import functools

import jax
import jax.numpy as jnp
from jax.experimental import pallas as pl
from jax.experimental.pallas import tpu as pltpu

# Target size for the double-buffered (input + output) blocks of one grid step.
# Multi-MB blocks already reach ~85% of HBM roofline; staying well under 32 MiB
# keeps the kernel safe on v7x (64 MiB physical VMEM) and under the raised
# scoped limit everywhere.
_VMEM_BLOCK_BUDGET = 12 * 1024 * 1024


def _pad_last_kernel(x_ref, o_ref, *, ph, pw, H, W):
    """Padding on the LAST two dims.  Blocks: x (B, H, W), o (B, Hout, Wout)."""
    b = o_ref.shape[0]
    Hout, Wout = H + 2 * ph, W + 2 * pw
    dt = o_ref.dtype
    if ph > 0:                                   # top / bottom strips
        z = jnp.zeros((b, ph, Wout), dt)
        o_ref[:, 0:ph, :] = z
        o_ref[:, ph + H:Hout, :] = z
    if pw > 0:                                   # left / right strips
        z = jnp.zeros((b, H, pw), dt)
        o_ref[:, ph:ph + H, 0:pw] = z
        o_ref[:, ph:ph + H, pw + W:Wout] = z
    o_ref[:, ph:ph + H, pw:pw + W] = x_ref[...]  # interior written exactly once


def _pad_leading_kernel(x_ref, o_ref, *, ph, pw, H, W):
    """Padding on the FIRST two dims; plane axis (last / lane) stays dense.

    Blocks: x (H, W, B), o (Hout, Wout, B).  All stores are full width along
    the 128-lane plane axis -> unmasked vst, no lane-offset shift for pad_w.
    """
    b = o_ref.shape[-1]
    Hout, Wout = H + 2 * ph, W + 2 * pw
    dt = o_ref.dtype
    if ph > 0:                                   # top / bottom strips
        z = jnp.zeros((ph, Wout, b), dt)
        o_ref[0:ph, :, :] = z
        o_ref[ph + H:Hout, :, :] = z
    if pw > 0:                                   # left / right strips
        z = jnp.zeros((H, pw, b), dt)
        o_ref[ph:ph + H, 0:pw, :] = z
        o_ref[ph:ph + H, pw + W:Wout, :] = z
    o_ref[ph:ph + H, pw:pw + W, :] = x_ref[...]  # interior written exactly once


def zero_pad(x, padding):
    """Equivalent of the PyTorch ZeroPad module: F.pad(x, (w, w, h, h)) on NCHW x.

    `padding` is an int (h == w) or a 2-sequence (h, w); padding is symmetric,
    exactly like the reference module (asymmetric 4-tuples are not part of the
    module's semantics).
    """
    if isinstance(padding, int):
        ph = pw = int(padding)
    else:
        ph, pw = int(padding[0]), int(padding[1])

    N, C, H, W = x.shape
    if ph == 0 and pw == 0:
        return x
    Hout, Wout = H + 2 * ph, W + 2 * pw
    NC = N * C
    itemsize = jnp.dtype(x.dtype).itemsize
    plane_bytes = (H * W + Hout * Wout) * itemsize   # HBM traffic per plane
    plane_db = 2 * plane_bytes                       # double-buffered in + out

    cost = pl.CostEstimate(flops=0, transcendentals=0,
                           bytes_accessed=int(NC * plane_bytes))
    cparams = pltpu.CompilerParams(
        dimension_semantics=("parallel",),           # v7x: planes on both TCs
        vmem_limit_bytes=32 * 1024 * 1024,           # raise v5e's 16 MiB default
    )

    # Layout choice: keep (NC, H, W) when W is already lane-dense (>= 128) or
    # there are fewer planes than output lanes; otherwise view as (H, W, NC)
    # so the large plane axis is the 128-lane dimension.
    use_lane_dense_nc = (Wout < 128) and (NC > Wout)
    if use_lane_dense_nc and NC > 128 and 128 * plane_db > _VMEM_BLOCK_BUDGET:
        # A 128-plane lane block would overflow the VMEM budget (very large
        # small-W planes) -> fall back to plane-batched NCHW tiling.
        use_lane_dense_nc = False

    if use_lane_dense_nc:
        if NC <= 128:
            bnc = NC                                 # full dim: exempt from /128
        else:
            fit = _VMEM_BLOCK_BUDGET // (128 * plane_db)
            bnc = 128 * max(1, min(fit, NC // 128))  # multiple of 128
        xt = jnp.transpose(x.reshape(NC, H, W), (1, 2, 0))   # (H, W, NC)
        kernel = functools.partial(_pad_leading_kernel, ph=ph, pw=pw, H=H, W=W)
        out_t = pl.pallas_call(
            kernel,
            out_shape=jax.ShapeDtypeStruct((Hout, Wout, NC), x.dtype),
            grid=(pl.cdiv(NC, bnc),),
            in_specs=[pl.BlockSpec((H, W, bnc), lambda i: (0, 0, i))],
            out_specs=pl.BlockSpec((Hout, Wout, bnc), lambda i: (0, 0, i)),
            compiler_params=cparams,
            cost_estimate=cost,
        )(xt)
        return jnp.transpose(out_t, (2, 0, 1)).reshape(N, C, Hout, Wout)

    # NCHW path: batch as many (n, c) planes per block as the budget allows.
    b = int(min(NC, max(1, _VMEM_BLOCK_BUDGET // plane_db)))
    x_flat = x.reshape(NC, H, W)
    kernel = functools.partial(_pad_last_kernel, ph=ph, pw=pw, H=H, W=W)
    out_flat = pl.pallas_call(
        kernel,
        out_shape=jax.ShapeDtypeStruct((NC, Hout, Wout), x.dtype),
        grid=(pl.cdiv(NC, b),),
        in_specs=[pl.BlockSpec((b, H, W), lambda i: (i, 0, 0))],
        out_specs=pl.BlockSpec((b, Hout, Wout), lambda i: (i, 0, 0)),
        compiler_params=cparams,
        cost_estimate=cost,
    )(x_flat)
    return out_flat.reshape(N, C, Hout, Wout)


if __name__ == "__main__":
    key = jax.random.PRNGKey(0)
    k1, k2, k3 = jax.random.split(key, 3)

    # Case 1: original small NCHW shape (few planes, small W) -> NCHW path.
    x1 = jax.random.normal(k1, (2, 4, 16, 16), dtype=jnp.float32)
    out1 = zero_pad(x1, (2, 3))                       # module: h=2, w=3
    ref1 = jnp.pad(x1, ((0, 0), (0, 0), (2, 2), (3, 3)))

    # Case 2: many channels, small W -> lane-dense (H, W, N*C) path.
    x2 = jax.random.normal(k2, (2, 128, 16, 16), dtype=jnp.float32)
    out2 = zero_pad(x2, 1)                            # module: h=w=1
    ref2 = jnp.pad(x2, ((0, 0), (0, 0), (1, 1), (1, 1)))

    # Case 3: wide W (already lane-dense) -> plane-batched NCHW path.
    x3 = jax.random.normal(k3, (1, 4, 8, 256), dtype=jnp.float32)
    out3 = zero_pad(x3, (3, 2))                       # module: h=3, w=2
    ref3 = jnp.pad(x3, ((0, 0), (0, 0), (3, 3), (2, 2)))

    jax.block_until_ready((out1, out2, out3))

    assert out1.shape == (2, 4, 20, 22), out1.shape
    assert jnp.array_equal(out1, ref1), "mismatch vs reference zero pad (case 1)"
    assert out2.shape == (2, 128, 18, 18), out2.shape
    assert jnp.array_equal(out2, ref2), "mismatch vs reference zero pad (case 2)"
    assert out3.shape == (1, 4, 14, 260), out3.shape
    assert jnp.array_equal(out3, ref3), "mismatch vs reference zero pad (case 3)"

    print("KERNEL_OK")
</pallas_src>

<mosaic_0001>
module attributes {stable_mosaic.version = 11 : i64} {
  func.func @_pad_last_kernel(%arg0: i32, %arg1: memref<8x16x16xf32, #tpu.memory_space<vmem>>, %arg2: memref<8x20x22xf32, #tpu.memory_space<vmem>>) attributes {dimension_semantics = [#tpu.dimension_semantics<parallel>], iteration_bounds = array<i64: 1>, scalar_prefetch = 0 : i64, scratch_operands = 0 : i64, tpu.core_type = #tpu.core_type<tc>, window_params = [{transform_indices = @transform_0, window_bounds = array<i64: 8, 16, 16>}, {transform_indices = @transform_1, window_bounds = array<i64: 8, 20, 22>}]} {
    %cst = arith.constant 0.000000e+00 : f32
    %0 = vector.broadcast %cst : f32 to vector<8x2x22xf32>
    %c0 = arith.constant 0 : index
    %c0_0 = arith.constant 0 : index
    %c0_1 = arith.constant 0 : index
    %1 = vector.load %arg2[%c0, %c0_0, %c0_1] : memref<8x20x22xf32, #tpu.memory_space<vmem>>, vector<8x2x22xf32>
    tpu.vector_store %arg2[%c0, %c0_0, %c0_1], %0 {strides = array<i32>} : memref<8x20x22xf32, #tpu.memory_space<vmem>>, vector<8x2x22xf32>,
    %c0_2 = arith.constant 0 : index
    %c18 = arith.constant 18 : index
    %c0_3 = arith.constant 0 : index
    %2 = vector.load %arg2[%c0_2, %c18, %c0_3] : memref<8x20x22xf32, #tpu.memory_space<vmem>>, vector<8x2x22xf32>
    tpu.vector_store %arg2[%c0_2, %c18, %c0_3], %0 {strides = array<i32>} : memref<8x20x22xf32, #tpu.memory_space<vmem>>, vector<8x2x22xf32>,
    %cst_4 = arith.constant 0.000000e+00 : f32
    %3 = vector.broadcast %cst_4 : f32 to vector<8x16x3xf32>
    %c0_5 = arith.constant 0 : index
    %c2 = arith.constant 2 : index
    %c0_6 = arith.constant 0 : index
    %4 = vector.load %arg2[%c0_5, %c2, %c0_6] : memref<8x20x22xf32, #tpu.memory_space<vmem>>, vector<8x16x3xf32>
    tpu.vector_store %arg2[%c0_5, %c2, %c0_6], %3 {strides = array<i32>} : memref<8x20x22xf32, #tpu.memory_space<vmem>>, vector<8x16x3xf32>,
    %c0_7 = arith.constant 0 : index
    %c2_8 = arith.constant 2 : index
    %c19 = arith.constant 19 : index
    %5 = vector.load %arg2[%c0_7, %c2_8, %c19] : memref<8x20x22xf32, #tpu.memory_space<vmem>>, vector<8x16x3xf32>
    tpu.vector_store %arg2[%c0_7, %c2_8, %c19], %3 {strides = array<i32>} : memref<8x20x22xf32, #tpu.memory_space<vmem>>, vector<8x16x3xf32>,
    %c0_9 = arith.constant 0 : index
    %c0_10 = arith.constant 0 : index
    %c0_11 = arith.constant 0 : index
    %6 = vector.load %arg1[%c0_9, %c0_10, %c0_11] : memref<8x16x16xf32, #tpu.memory_space<vmem>>, vector<8x16x16xf32>
    %c0_12 = arith.constant 0 : index
    %c2_13 = arith.constant 2 : index
    %c3 = arith.constant 3 : index
    %7 = vector.load %arg2[%c0_12, %c2_13, %c3] : memref<8x20x22xf32, #tpu.memory_space<vmem>>, vector<8x16x16xf32>
    tpu.vector_store %arg2[%c0_12, %c2_13, %c3], %6 {strides = array<i32>} : memref<8x20x22xf32, #tpu.memory_space<vmem>>, vector<8x16x16xf32>,
    return
  }
  func.func @transform_0(%arg0: i32) -> (i32, i32, i32) {
    %c0_i32 = arith.constant 0 : i32
    %c0_i32_0 = arith.constant 0 : i32
    %c0_i32_1 = arith.constant 0 : i32
    return %arg0, %c0_i32, %c0_i32_0 : i32, i32, i32
  }
  func.func @transform_1(%arg0: i32) -> (i32, i32, i32) {
    %c0_i32 = arith.constant 0 : i32
    %c0_i32_0 = arith.constant 0 : i32
    %c0_i32_1 = arith.constant 0 : i32
    return %arg0, %c0_i32, %c0_i32_0 : i32, i32, i32
  }
}

</mosaic_0001>

<llo_original>
// kernel: tpu_custom_call.1
$region0: #{tpu_custom_call.1}
  #allocation0 [shape = 'u32[]', space=smem, size = 0x4, offset = 0x4, fixed_abs, tag = 'smem constant byte address 0x4 - core index']
  #allocation1 [shape = 'u32[72,128]{1,0:T(1,128)}', space=vmem, size = 0x9000, scoped, tag = 'internal scratch']
  %s0 = inlined_call_operand.hbm [shape: f32[8,16,16], index: 0, kind: input, shape index: {}]
  %s1 = inlined_call_operand.vmem [shape: f32[8,20,22], index: 1, kind: output, shape index: {}]
  %s2 = sld [smem:[#allocation0]]
  $region18: #{tpu_custom_call.1} parent=0
    _
  %s4 = ssub.s32 1, %s2
  %s5 = scalar_select 0, %s4, %s2
  $region1: #{tpu_custom_call.1} parent=0
    #allocation2 [shape = 'u8[65536]{0}', space=vmem, size = 0x10000, scoped, tag = 'input window, operand 0, single buffered']
    #allocation3 [shape = 's32[1]{0}', space=sflag, size = 0x4, scoped, tag = 'scoped memory for tpu_custom_call.1']
    %6 = vsyncpa [#allocation3], 0
    // Predicated region
    $region2: #{tpu_custom_call.1} parent=1 // pred_check
      _
    $region3: #{tpu_custom_call.1} parent=1 // pred_check_branch
      %8 = sbr.rel (0) target = $region5
    $region4: #{tpu_custom_call.1} parent=1 // pred_region
      %10 = vsyncadd [#allocation3], 0
      %s11 = sshll.u32 %s0, 4
      %s12 = int_to_ptr.hbm [resolvable:$true] %s11
      %s13 = sshll.u32 [#allocation2], 4
      %s14 = int_to_ptr.vmem [resolvable:$true] %s13
      %19 = dma.hbm_to_vmem [thread:$0]  %s12, 2048, %s14, [#allocation3], 128, 128, 8
    $region5: #{tpu_custom_call.1} parent=1 // pred_fallthru
      _
    // Predicated region
    $region6: #{tpu_custom_call.1} parent=1 // pred_check
      _
    $region7: #{tpu_custom_call.1} parent=1 // pred_check_branch
      %21 = sbr.rel (0) target = $region9
    $region8: #{tpu_custom_call.1} parent=1 // pred_region
      %23 = dma.done [#allocation3], 2048
    $region9: #{tpu_custom_call.1} parent=1 // pred_fallthru
      _
    %vm24 = vcmask 173056
    %25 = vst.msk [vmem:[%s1] sm:$0x3] %vm24, 0.0
    %26 = vst.msk [vmem:[%s1 + $0x18] sm:$0x3] %vm24, 0.0
    %27 = vst.msk [vmem:[%s1 + $0x30] sm:$0x3] %vm24, 0.0
    %28 = vst.msk [vmem:[%s1 + $0x48] sm:$0x3] %vm24, 0.0
    %29 = vst.msk [vmem:[%s1 + $0x60] sm:$0x3] %vm24, 0.0
    %30 = vst.msk [vmem:[%s1 + $0x78] sm:$0x3] %vm24, 0.0
    %31 = vst.msk [vmem:[%s1 + $0x90] sm:$0x3] %vm24, 0.0
    %32 = vst.msk [vmem:[%s1 + $0xa8] sm:$0x3] %vm24, 0.0
    %33 = vst.msk [vmem:[%s1 + $0x12] sm:$0x3] %vm24, 0.0
    %34 = vst.msk [vmem:[%s1 + $0x2a] sm:$0x3] %vm24, 0.0
    %35 = vst.msk [vmem:[%s1 + $0x42] sm:$0x3] %vm24, 0.0
    %36 = vst.msk [vmem:[%s1 + $0x5a] sm:$0x3] %vm24, 0.0
    %37 = vst.msk [vmem:[%s1 + $0x72] sm:$0x3] %vm24, 0.0
    %38 = vst.msk [vmem:[%s1 + $0x8a] sm:$0x3] %vm24, 0.0
    %39 = vst.msk [vmem:[%s1 + $0xa2] sm:$0x3] %vm24, 0.0
    %40 = vst.msk [vmem:[%s1 + $0xba] sm:$0x3] %vm24, 0.0
    %vm41 = vcmask 23552
    %42 = vst.msk [vmem:[%s1 + $0x2] sm:$0xff] %vm41, 0.0
    %43 = vst.msk [vmem:[%s1 + $0xa] sm:$0xff] %vm41, 0.0
    %44 = vst.msk [vmem:[%s1 + $0x1a] sm:$0xff] %vm41, 0.0
    %45 = vst.msk [vmem:[%s1 + $0x22] sm:$0xff] %vm41, 0.0
    %46 = vst.msk [vmem:[%s1 + $0x32] sm:$0xff] %vm41, 0.0
    %47 = vst.msk [vmem:[%s1 + $0x3a] sm:$0xff] %vm41, 0.0
    %48 = vst.msk [vmem:[%s1 + $0x4a] sm:$0xff] %vm41, 0.0
    %49 = vst.msk [vmem:[%s1 + $0x52] sm:$0xff] %vm41, 0.0
    %50 = vst.msk [vmem:[%s1 + $0x62] sm:$0xff] %vm41, 0.0
    %51 = vst.msk [vmem:[%s1 + $0x6a] sm:$0xff] %vm41, 0.0
    %52 = vst.msk [vmem:[%s1 + $0x7a] sm:$0xff] %vm41, 0.0
    %53 = vst.msk [vmem:[%s1 + $0x82] sm:$0xff] %vm41, 0.0
    %54 = vst.msk [vmem:[%s1 + $0x92] sm:$0xff] %vm41, 0.0
    %55 = vst.msk [vmem:[%s1 + $0x9a] sm:$0xff] %vm41, 0.0
    %56 = vst.msk [vmem:[%s1 + $0xaa] sm:$0xff] %vm41, 0.0
    %57 = vst.msk [vmem:[%s1 + $0xb2] sm:$0xff] %vm41, 0.0
    %vm58 = vcmask 179352
    %59 = vst.msk [vmem:[%s1 + $0x2] sm:$0xff] %vm58, 0.0
    %60 = vst.msk [vmem:[%s1 + $0xa] sm:$0xff] %vm58, 0.0
    %61 = vst.msk [vmem:[%s1 + $0x1a] sm:$0xff] %vm58, 0.0
    %62 = vst.msk [vmem:[%s1 + $0x22] sm:$0xff] %vm58, 0.0
    %63 = vst.msk [vmem:[%s1 + $0x32] sm:$0xff] %vm58, 0.0
    %64 = vst.msk [vmem:[%s1 + $0x3a] sm:$0xff] %vm58, 0.0
    %65 = vst.msk [vmem:[%s1 + $0x4a] sm:$0xff] %vm58, 0.0
    %66 = vst.msk [vmem:[%s1 + $0x52] sm:$0xff] %vm58, 0.0
    %67 = vst.msk [vmem:[%s1 + $0x62] sm:$0xff] %vm58, 0.0
    %68 = vst.msk [vmem:[%s1 + $0x6a] sm:$0xff] %vm58, 0.0
    %69 = vst.msk [vmem:[%s1 + $0x7a] sm:$0xff] %vm58, 0.0
    %70 = vst.msk [vmem:[%s1 + $0x82] sm:$0xff] %vm58, 0.0
    %71 = vst.msk [vmem:[%s1 + $0x92] sm:$0xff] %vm58, 0.0
    %72 = vst.msk [vmem:[%s1 + $0x9a] sm:$0xff] %vm58, 0.0
    %73 = vst.msk [vmem:[%s1 + $0xaa] sm:$0xff] %vm58, 0.0
    %74 = vst.msk [vmem:[%s1 + $0xb2] sm:$0xff] %vm58, 0.0
    %v75 = vld [vmem:[#allocation2] sm:$0xff]
    %v76 = vld [vmem:[#allocation2 + $0x8] sm:$0xff]
    %v77 = vld [vmem:[#allocation2 + $0x10] sm:$0xff]
    %v78 = vld [vmem:[#allocation2 + $0x18] sm:$0xff]
    %v79 = vld [vmem:[#allocation2 + $0x20] sm:$0xff]
    %v80 = vld [vmem:[#allocation2 + $0x28] sm:$0xff]
    %v81 = vld [vmem:[#allocation2 + $0x30] sm:$0xff]
    %v82 = vld [vmem:[#allocation2 + $0x38] sm:$0xff]
    %v83 = vld [vmem:[#allocation2 + $0x40] sm:$0xff]
    %v84 = vld [vmem:[#allocation2 + $0x48] sm:$0xff]
    %v85 = vld [vmem:[#allocation2 + $0x50] sm:$0xff]
    %v86 = vld [vmem:[#allocation2 + $0x58] sm:$0xff]
    %v87 = vld [vmem:[#allocation2 + $0x60] sm:$0xff]
    %v88 = vld [vmem:[#allocation2 + $0x68] sm:$0xff]
    %v89 = vld [vmem:[#allocation2 + $0x70] sm:$0xff]
    %v90 = vld [vmem:[#allocation2 + $0x78] sm:$0xff]
    %107 = vrot.lane.b32.xlu0 %v75, 3
    %v108 = vpop.permute.xlu0 %107
    %109 = vrot.lane.b32.xlu0 %v76, 3
    %v110 = vpop.permute.xlu0 %109
    %111 = vrot.lane.b32.xlu0 %v77, 3
    %v112 = vpop.permute.xlu0 %111
    %113 = vrot.lane.b32.xlu0 %v78, 3
    %v114 = vpop.permute.xlu0 %113
    %115 = vrot.lane.b32.xlu0 %v79, 3
    %v116 = vpop.permute.xlu0 %115
    %117 = vrot.lane.b32.xlu0 %v80, 3
    %v118 = vpop.permute.xlu0 %117
    %119 = vrot.lane.b32.xlu0 %v81, 3
    %v120 = vpop.permute.xlu0 %119
    %121 = vrot.lane.b32.xlu0 %v82, 3
    %v122 = vpop.permute.xlu0 %121
    %123 = vrot.lane.b32.xlu0 %v83, 3
    %v124 = vpop.permute.xlu0 %123
    %125 = vrot.lane.b32.xlu0 %v84, 3
    %v126 = vpop.permute.xlu0 %125
    %127 = vrot.lane.b32.xlu0 %v85, 3
    %v128 = vpop.permute.xlu0 %127
    %129 = vrot.lane.b32.xlu0 %v86, 3
    %v130 = vpop.permute.xlu0 %129
    %131 = vrot.lane.b32.xlu0 %v87, 3
    %v132 = vpop.permute.xlu0 %131
    %133 = vrot.lane.b32.xlu0 %v88, 3
    %v134 = vpop.permute.xlu0 %133
    %135 = vrot.lane.b32.xlu0 %v89, 3
    %v136 = vpop.permute.xlu0 %135
    %137 = vrot.lane.b32.xlu0 %v90, 3
    %v138 = vpop.permute.xlu0 %137
    %vm155 = vcmask 154648
    %156 = vst.msk [vmem:[%s1 + $0x2] sm:$0xff] %vm155, %v108
    %157 = vst.msk [vmem:[%s1 + $0xa] sm:$0xff] %vm155, %v110
    %158 = vst.msk [vmem:[%s1 + $0x1a] sm:$0xff] %vm155, %v112
    %159 = vst.msk [vmem:[%s1 + $0x22] sm:$0xff] %vm155, %v114
    %160 = vst.msk [vmem:[%s1 + $0x32] sm:$0xff] %vm155, %v116
    %161 = vst.msk [vmem:[%s1 + $0x3a] sm:$0xff] %vm155, %v118
    %162 = vst.msk [vmem:[%s1 + $0x4a] sm:$0xff] %vm155, %v120
    %163 = vst.msk [vmem:[%s1 + $0x52] sm:$0xff] %vm155, %v122
    %164 = vst.msk [vmem:[%s1 + $0x62] sm:$0xff] %vm155, %v124
    %165 = vst.msk [vmem:[%s1 + $0x6a] sm:$0xff] %vm155, %v126
    %166 = vst.msk [vmem:[%s1 + $0x7a] sm:$0xff] %vm155, %v128
    %167 = vst.msk [vmem:[%s1 + $0x82] sm:$0xff] %vm155, %v130
    %168 = vst.msk [vmem:[%s1 + $0x92] sm:$0xff] %vm155, %v132
    %169 = vst.msk [vmem:[%s1 + $0x9a] sm:$0xff] %vm155, %v134
    %170 = vst.msk [vmem:[%s1 + $0xaa] sm:$0xff] %vm155, %v136
    %171 = vst.msk [vmem:[%s1 + $0xb2] sm:$0xff] %vm155, %v138
    // Predicated region
    $region10: #{tpu_custom_call.1} parent=1 // pred_check
      _
    $region11: #{tpu_custom_call.1} parent=1 // pred_check_branch
      %173 = sbr.rel (0) target = $region13
    $region12: #{tpu_custom_call.1} parent=1 // pred_region
      _
    $region13: #{tpu_custom_call.1} parent=1 // pred_fallthru
      _
    // Predicated region
    $region14: #{tpu_custom_call.1} parent=1 // pred_check
      _
    $region15: #{tpu_custom_call.1} parent=1 // pred_check_branch
      %175 = sbr.rel (0) target = $region17
    $region16: #{tpu_custom_call.1} parent=1 // pred_region
      _
    $region17: #{tpu_custom_call.1} parent=1 // pred_fallthru
      _
    %176 = vsyncpa [#allocation3], 1

</llo_original>
